<compile_context>
chip_gen: v7x
topology: tpu7x:2x2x1
jax: 0.10.0
libtpu: 0.0.40
codegen_flags: <defaults>
</compile_context>

<pallas_src>
import math

import jax
import jax.numpy as jnp
from jax.experimental import pallas as pl
from jax.experimental.pallas import tpu as pltpu

_MiB = 1024 * 1024


def _round_up(x, m):
    return ((x + m - 1) // m) * m


def _gelu_exact(h):
    # torch.nn.GELU() default (erf formulation), computed in f32.
    return 0.5 * h * (1.0 + jax.lax.erf(h * 0.7071067811865475))


# ----------------------------------------------------------------------------- kernels
def _ffn_resident_kernel(x_ref, w1_ref, b1_ref, w2_ref, b2_ref, o_ref):
    # Weights fully VMEM-resident: fetched once (constant index_map), reused for
    # every row tile.  Single pass: matmul -> bias -> GELU -> matmul -> bias.
    x = x_ref[...].astype(jnp.bfloat16)
    h = jnp.dot(x, w1_ref[...], preferred_element_type=jnp.float32) + b1_ref[...]
    h = _gelu_exact(h)
    y = jnp.dot(h.astype(jnp.bfloat16), w2_ref[...],
                preferred_element_type=jnp.float32)
    o_ref[...] = y + b2_ref[...]
    # TODO(synk): training-mode dropout (p in {0.2, 0.3, 0.5}) would use
    # pltpu.prng_seed / pltpu.prng_random_bits and scale by 1/(1-p) here;
    # eval-mode dropout is identity.


def _ffn_stream_kernel(x_ref, w1_ref, b1_ref, w2_ref, b2_ref, o_ref):
    # grid = (row tiles, hidden slabs).  The hidden axis (last, "arbitrary") is the
    # reduction axis of the second matmul.  The output block index is j-independent,
    # so o_ref (f32) stays VMEM-resident across the j sweep and doubles as the
    # accumulator (no scratch needed).
    j = pl.program_id(1)
    x = x_ref[...].astype(jnp.bfloat16)
    h = jnp.dot(x, w1_ref[...], preferred_element_type=jnp.float32) + b1_ref[...]
    h = _gelu_exact(h)
    contrib = jnp.dot(h.astype(jnp.bfloat16), w2_ref[...],
                      preferred_element_type=jnp.float32)

    @pl.when(j == 0)
    def _init():
        o_ref[...] = contrib + b2_ref[...]  # b2 added exactly once

    @pl.when(j > 0)
    def _accumulate():
        o_ref[...] += contrib
    # TODO(synk): training-mode dropout would be applied in the last-j branch.


# ----------------------------------------------------------------------------- sizing
def _budget_resident(tm, Cp, Hp, x_bytes):
    return (2 * tm * Cp * x_bytes      # x tile (double-buffered)
            + 2 * Cp * Hp * 2          # W1 (bf16; 2 buffers budgeted conservatively)
            + 2 * Hp * 4               # b1 (f32)
            + 2 * Hp * Cp * 2          # W2 (bf16)
            + 2 * Cp * 4               # b2 (f32)
            + 2 * tm * Cp * 4          # output tile (f32)
            + tm * Hp * 6)             # GELU intermediate h (f32 + bf16 copy)


def _budget_stream(tm, th, Cp, x_bytes):
    return (2 * tm * Cp * x_bytes
            + 2 * Cp * th * 2
            + 2 * th * 4
            + 2 * th * Cp * 2
            + 2 * Cp * 4
            + 2 * tm * Cp * 4
            + tm * th * 6)


def _tpu_generation_config():
    """Returns (tm_default, th_default, vmem_cap_bytes, cores_per_chip)."""
    kind = ""
    try:
        kind = jax.devices()[0].device_kind.lower()
    except Exception:
        pass
    if "v7" in kind:
        return 512, 1024, 48 * _MiB, 2     # 64 MiB physical VMEM per TC -> headroom
    if "v6" in kind:
        return 1024, 1024, 100 * _MiB, 1   # HBM-BW-limited unless tm is large
    if "v5" in kind:
        return 256, 1024, 100 * _MiB, 1
    return 256, 512, 32 * _MiB, 1          # unknown: conservative


def _prep_matrix(w, rp, cp):
    r, c = w.shape
    if w.dtype == jnp.bfloat16 and (r, c) == (rp, cp):
        return w  # already padded / pre-cast: no per-call pass over the weights
    return jnp.zeros((rp, cp), jnp.bfloat16).at[:r, :c].set(w.astype(jnp.bfloat16))


def _prep_bias(b, np_):
    n = b.shape[0]
    b = b.astype(jnp.float32)
    if n == np_:
        return b.reshape(1, n)
    return jnp.zeros((1, np_), jnp.float32).at[0, :n].set(b)


# ----------------------------------------------------------------------------- wrapper
def feedforward(x, w1, b1, w2, b2, *, tm=None, th=None, force_stream=False):
    """Eval-mode FFN: Linear(C->4C) -> GELU(erf) -> Linear(4C->C) [-> Dropout=id].

    x: (B, T, C); w1: (C, H); b1: (H,); w2: (H, C); b2: (C,).  Returns (B, T, C).
    """
    B, T, C = x.shape
    H = w1.shape[1]
    M = B * T

    tm_def, th_def, vmem_cap, n_cores = _tpu_generation_config()
    tm = tm_def if tm is None else tm
    th = th_def if th is None else th

    Cp = _round_up(C, 128)
    Hp128 = _round_up(H, 128)

    tm_eff = min(_round_up(tm, 8), _round_up(M, 8))
    # v7x megacore: keep >= n_cores row tiles so both TensorCores get work.
    while n_cores > 1 and _round_up(M, tm_eff) // tm_eff < n_cores and tm_eff > 256:
        tm_eff = max(256, _round_up(tm_eff // 2, 8))

    margin = 0.85
    resident = (not force_stream
                and _budget_resident(tm_eff, Cp, Hp128, 4) <= margin * vmem_cap)

    if resident:
        Hp = Hp128
        th_eff = Hp
        budget = _budget_resident(tm_eff, Cp, Hp, 4)
    else:
        th_eff = min(_round_up(th, 128), Hp128)
        while (_budget_stream(tm_eff, th_eff, Cp, 4) > margin * vmem_cap
               and th_eff > 256):
            th_eff = max(256, _round_up(th_eff // 2, 128))
        while (_budget_stream(tm_eff, th_eff, Cp, 4) > margin * vmem_cap
               and tm_eff > 256):
            tm_eff = max(256, _round_up(tm_eff // 2, 8))
        Hp = _round_up(H, th_eff)
        budget = _budget_stream(tm_eff, th_eff, Cp, 4)

    Mp = _round_up(M, tm_eff)
    vmem_limit = int(min(vmem_cap, max(32 * _MiB, int(budget * 1.25))))

    # Inputs: pad/cast only when needed.  If padding is required anyway, cast x to
    # bf16 while padding (halves the kernel's x DMA); otherwise pass f32 through and
    # cast to bf16 inside the kernel (x is read exactly once there).
    x2d = x.reshape(M, C)
    if Mp != M or Cp != C:
        x_in = jnp.zeros((Mp, Cp), jnp.bfloat16).at[:M, :C].set(
            x2d.astype(jnp.bfloat16))
    else:
        x_in = x2d
    w1p = _prep_matrix(w1, Cp, Hp)
    b1p = _prep_bias(b1, Hp)
    w2p = _prep_matrix(w2, Hp, Cp)
    b2p = _prep_bias(b2, Cp)

    if resident:
        out = pl.pallas_call(
            _ffn_resident_kernel,
            out_shape=jax.ShapeDtypeStruct((Mp, Cp), jnp.float32),
            grid_spec=pltpu.PrefetchScalarGridSpec(
                num_scalar_prefetch=0,
                grid=(Mp // tm_eff,),
                in_specs=[
                    pl.BlockSpec((tm_eff, Cp), lambda i: (i, 0)),   # x rows
                    pl.BlockSpec((Cp, Hp), lambda i: (0, 0)),       # W1 (resident)
                    pl.BlockSpec((1, Hp), lambda i: (0, 0)),        # b1
                    pl.BlockSpec((Hp, Cp), lambda i: (0, 0)),       # W2 (resident)
                    pl.BlockSpec((1, Cp), lambda i: (0, 0)),        # b2
                ],
                out_specs=pl.BlockSpec((tm_eff, Cp), lambda i: (i, 0)),
            ),
            compiler_params=pltpu.CompilerParams(
                dimension_semantics=("parallel",),
                vmem_limit_bytes=vmem_limit,
            ),
        )(x_in, w1p, b1p, w2p, b2p)
    else:
        out = pl.pallas_call(
            _ffn_stream_kernel,
            out_shape=jax.ShapeDtypeStruct((Mp, Cp), jnp.float32),
            grid_spec=pltpu.PrefetchScalarGridSpec(
                num_scalar_prefetch=0,
                grid=(Mp // tm_eff, Hp // th_eff),
                in_specs=[
                    pl.BlockSpec((tm_eff, Cp), lambda i, j: (i, 0)),  # x rows
                    pl.BlockSpec((Cp, th_eff), lambda i, j: (0, j)),  # W1 slab
                    pl.BlockSpec((1, th_eff), lambda i, j: (0, j)),   # b1 slab
                    pl.BlockSpec((th_eff, Cp), lambda i, j: (j, 0)),  # W2 slab
                    pl.BlockSpec((1, Cp), lambda i, j: (0, 0)),       # b2
                ],
                out_specs=pl.BlockSpec((tm_eff, Cp), lambda i, j: (i, 0)),
            ),
            compiler_params=pltpu.CompilerParams(
                dimension_semantics=("parallel", "arbitrary"),
                vmem_limit_bytes=vmem_limit,
            ),
        )(x_in, w1p, b1p, w2p, b2p)

    if Mp != M or Cp != C:
        out = out[:M, :C]
    return out.reshape(B, T, C).astype(x.dtype)


# ----------------------------------------------------------------------------- helpers
def init_params(key, n_embd):
    """Deterministic init mimicking nn.Linear's U(-1/sqrt(fan_in), 1/sqrt(fan_in))."""
    hidden = 4 * n_embd
    k1, k2, k3, k4 = jax.random.split(key, 4)
    bound1 = 1.0 / math.sqrt(n_embd)
    bound2 = 1.0 / math.sqrt(hidden)
    w1 = jax.random.uniform(k1, (n_embd, hidden), jnp.float32, -bound1, bound1)
    b1 = jax.random.uniform(k2, (hidden,), jnp.float32, -bound1, bound1)
    w2 = jax.random.uniform(k3, (hidden, n_embd), jnp.float32, -bound2, bound2)
    b2 = jax.random.uniform(k4, (n_embd,), jnp.float32, -bound2, bound2)
    return w1, b1, w2, b2


def _reference_bf16(x, w1, b1, w2, b2):
    """Same bf16-matmul / f32-accumulate math as the kernel (tight tolerance)."""
    B, T, C = x.shape
    xb = x.reshape(-1, C).astype(jnp.bfloat16)
    h = jnp.dot(xb, w1.astype(jnp.bfloat16), preferred_element_type=jnp.float32) + b1
    h = _gelu_exact(h)
    y = jnp.dot(h.astype(jnp.bfloat16), w2.astype(jnp.bfloat16),
                preferred_element_type=jnp.float32) + b2
    return y.reshape(B, T, C)


def _reference_f32(x, w1, b1, w2, b2):
    """Full f32 PyTorch-equivalent forward (loose tolerance for bf16 matmuls)."""
    B, T, C = x.shape
    h = x.reshape(-1, C) @ w1 + b1
    h = 0.5 * h * (1.0 + jax.lax.erf(h / jnp.sqrt(2.0)))
    return (h @ w2 + b2).reshape(B, T, C)


if __name__ == "__main__":
    key = jax.random.PRNGKey(0)
    k1, k2, k3, k4 = jax.random.split(key, 4)

    # Test 1: n_embd=32, B=2, T=8 -- weights-resident single-axis structure.
    n_embd = 32
    B, T = 2, 8
    x = jax.random.normal(k1, (B, T, n_embd), jnp.float32)
    w1, b1, w2, b2 = init_params(k2, n_embd)
    y = jax.block_until_ready(feedforward(x, w1, b1, w2, b2))
    assert jnp.allclose(y, _reference_bf16(x, w1, b1, w2, b2), atol=1e-3, rtol=1e-3), \
        "test1: mismatch vs bf16 reference"
    assert jnp.allclose(y, _reference_f32(x, w1, b1, w2, b2), atol=3e-2, rtol=3e-2), \
        "test1: mismatch vs f32 reference"

    # Test 2: n_embd=128 with tiny tiles forced onto the streaming path so the
    # multi-row-tile and multi-H-slab (j > 0) accumulation branches are exercised.
    n_embd = 128
    x = jax.random.normal(k3, (B, T, n_embd), jnp.float32)
    w1, b1, w2, b2 = init_params(k4, n_embd)
    y = jax.block_until_ready(
        feedforward(x, w1, b1, w2, b2, tm=8, th=128, force_stream=True))
    assert jnp.allclose(y, _reference_bf16(x, w1, b1, w2, b2), atol=1e-3, rtol=1e-3), \
        "test2: mismatch vs bf16 reference"
    assert jnp.allclose(y, _reference_f32(x, w1, b1, w2, b2), atol=3e-2, rtol=3e-2), \
        "test2: mismatch vs f32 reference"

    print("KERNEL_OK")
</pallas_src>

<mosaic_0001>
module attributes {stable_mosaic.version = 11 : i64} {
  func.func @_ffn_resident_kernel(%arg0: i32, %arg1: memref<16x128xbf16, #tpu.memory_space<vmem>>, %arg2: memref<128x128xbf16, #tpu.memory_space<vmem>>, %arg3: memref<1x128xf32, #tpu.memory_space<vmem>>, %arg4: memref<128x128xbf16, #tpu.memory_space<vmem>>, %arg5: memref<1x128xf32, #tpu.memory_space<vmem>>, %arg6: memref<16x128xf32, #tpu.memory_space<vmem>>) attributes {dimension_semantics = [#tpu.dimension_semantics<parallel>], iteration_bounds = array<i64: 1>, scalar_prefetch = 0 : i64, scratch_operands = 0 : i64, tpu.core_type = #tpu.core_type<tc>, window_params = [{transform_indices = @transform_0, window_bounds = array<i64: 16, 128>}, {pipeline_mode = #tpu.pipeline_mode<synchronous>, transform_indices = @transform_1, window_bounds = array<i64: 128, 128>}, {pipeline_mode = #tpu.pipeline_mode<synchronous>, transform_indices = @transform_2, window_bounds = array<i64: 1, 128>}, {pipeline_mode = #tpu.pipeline_mode<synchronous>, transform_indices = @transform_3, window_bounds = array<i64: 128, 128>}, {pipeline_mode = #tpu.pipeline_mode<synchronous>, transform_indices = @transform_4, window_bounds = array<i64: 1, 128>}, {transform_indices = @transform_5, window_bounds = array<i64: 16, 128>}]} {
    %c0 = arith.constant 0 : index
    %c0_0 = arith.constant 0 : index
    %0 = vector.load %arg1[%c0, %c0_0] : memref<16x128xbf16, #tpu.memory_space<vmem>>, vector<16x128xbf16>
    %c0_1 = arith.constant 0 : index
    %c0_2 = arith.constant 0 : index
    %1 = vector.load %arg2[%c0_1, %c0_2] : memref<128x128xbf16, #tpu.memory_space<vmem>>, vector<128x128xbf16>
    %cst = arith.constant dense<0.000000e+00> : vector<16x128xf32>
    %2 = tpu.matmul %0, %1, %cst {dimension_numbers = #tpu.dot_dimension_numbers<[1], [0], [0], [1], [0, 0, 1, 1], [], []>} : vector<16x128xbf16>, vector<128x128xbf16>, vector<16x128xf32> -> vector<16x128xf32>
    %c0_3 = arith.constant 0 : index
    %c0_4 = arith.constant 0 : index
    %3 = vector.load %arg3[%c0_3, %c0_4] : memref<1x128xf32, #tpu.memory_space<vmem>>, vector<1x128xf32>
    %4 = vector.broadcast %3 : vector<1x128xf32> to vector<16x128xf32>
    %5 = arith.addf %2, %4 : vector<16x128xf32>
    %cst_5 = arith.constant 5.000000e-01 : f32
    %6 = vector.broadcast %cst_5 : f32 to vector<16x128xf32>
    %7 = arith.mulf %6, %5 : vector<16x128xf32>
    %cst_6 = arith.constant 0.707106769 : f32
    %8 = vector.broadcast %cst_6 : f32 to vector<16x128xf32>
    %9 = arith.mulf %5, %8 : vector<16x128xf32>
    %10 = math.erf %9 : vector<16x128xf32>
    %cst_7 = arith.constant 1.000000e+00 : f32
    %11 = vector.broadcast %cst_7 : f32 to vector<16x128xf32>
    %12 = arith.addf %11, %10 : vector<16x128xf32>
    %13 = arith.mulf %7, %12 : vector<16x128xf32>
    %14 = arith.truncf %13 : vector<16x128xf32> to vector<16x128xbf16>
    %c0_8 = arith.constant 0 : index
    %c0_9 = arith.constant 0 : index
    %15 = vector.load %arg4[%c0_8, %c0_9] : memref<128x128xbf16, #tpu.memory_space<vmem>>, vector<128x128xbf16>
    %cst_10 = arith.constant dense<0.000000e+00> : vector<16x128xf32>
    %16 = tpu.matmul %14, %15, %cst_10 {dimension_numbers = #tpu.dot_dimension_numbers<[1], [0], [0], [1], [0, 0, 1, 1], [], []>} : vector<16x128xbf16>, vector<128x128xbf16>, vector<16x128xf32> -> vector<16x128xf32>
    %c0_11 = arith.constant 0 : index
    %c0_12 = arith.constant 0 : index
    %17 = vector.load %arg5[%c0_11, %c0_12] : memref<1x128xf32, #tpu.memory_space<vmem>>, vector<1x128xf32>
    %18 = vector.broadcast %17 : vector<1x128xf32> to vector<16x128xf32>
    %19 = arith.addf %16, %18 : vector<16x128xf32>
    %c0_13 = arith.constant 0 : index
    %c0_14 = arith.constant 0 : index
    %20 = vector.load %arg6[%c0_13, %c0_14] : memref<16x128xf32, #tpu.memory_space<vmem>>, vector<16x128xf32>
    tpu.vector_store %arg6[%c0_13, %c0_14], %19 {strides = array<i32>} : memref<16x128xf32, #tpu.memory_space<vmem>>, vector<16x128xf32>,
    return
  }
  func.func @transform_0(%arg0: i32) -> (i32, i32) {
    %c0_i32 = arith.constant 0 : i32
    %c0_i32_0 = arith.constant 0 : i32
    return %arg0, %c0_i32 : i32, i32
  }
  func.func @transform_1(%arg0: i32) -> (i32, i32) {
    %c0_i32 = arith.constant 0 : i32
    %c0_i32_0 = arith.constant 0 : i32
    %c0_i32_1 = arith.constant 0 : i32
    return %c0_i32, %c0_i32_0 : i32, i32
  }
  func.func @transform_2(%arg0: i32) -> (i32, i32) {
    %c0_i32 = arith.constant 0 : i32
    %c0_i32_0 = arith.constant 0 : i32
    %c0_i32_1 = arith.constant 0 : i32
    return %c0_i32, %c0_i32_0 : i32, i32
  }
  func.func @transform_3(%arg0: i32) -> (i32, i32) {
    %c0_i32 = arith.constant 0 : i32
    %c0_i32_0 = arith.constant 0 : i32
    %c0_i32_1 = arith.constant 0 : i32
    return %c0_i32, %c0_i32_0 : i32, i32
  }
  func.func @transform_4(%arg0: i32) -> (i32, i32) {
    %c0_i32 = arith.constant 0 : i32
    %c0_i32_0 = arith.constant 0 : i32
    %c0_i32_1 = arith.constant 0 : i32
    return %c0_i32, %c0_i32_0 : i32, i32
  }
  func.func @transform_5(%arg0: i32) -> (i32, i32) {
    %c0_i32 = arith.constant 0 : i32
    %c0_i32_0 = arith.constant 0 : i32
    return %arg0, %c0_i32 : i32, i32
  }
}

</mosaic_0001>

<llo_original>
// kernel: tpu_custom_call.1
$region0: #{tpu_custom_call.1}
  #allocation0 [shape = 'u32[]', space=smem, size = 0x4, offset = 0x4, fixed_abs, tag = 'smem constant byte address 0x4 - core index']
  #allocation1 [shape = 'u32[144,128]{1,0:T(1,128)}', space=vmem, size = 0x12000, scoped, tag = 'internal scratch']
  %s0 = inlined_call_operand.hbm [shape: bf16[16,128], index: 0, kind: input, shape index: {}]
  %s1 = inlined_call_operand.hbm [shape: bf16[128,128], index: 1, kind: input, shape index: {}]
  %s2 = inlined_call_operand.vmem [shape: f32[1,128], index: 2, kind: input, shape index: {}]
  %s3 = inlined_call_operand.hbm [shape: bf16[128,128], index: 3, kind: input, shape index: {}]
  %s4 = inlined_call_operand.vmem [shape: f32[1,128], index: 4, kind: input, shape index: {}]
  %s5 = inlined_call_operand.hbm [shape: f32[16,128], index: 5, kind: output, shape index: {}]
  %s6 = sld [smem:[#allocation0]]
  $region42: #{tpu_custom_call.1} parent=0
    _
  %s8 = ssub.s32 1, %s6
  %s9 = scalar_select 0, %s8, %s6
  $region1: #{tpu_custom_call.1} parent=0
    #allocation2 [shape = 'u8[4096]{0}', space=vmem, size = 0x1000, scoped, tag = 'input window, operand 0, single buffered']
    #allocation3 [shape = 's32[1]{0}', space=sflag, size = 0x4, scoped, tag = 'scoped memory for tpu_custom_call.1']
    #allocation4 [shape = 's32[1]{0}', space=sflag, size = 0x4, scoped, tag = 'scoped memory for tpu_custom_call.1']
    #allocation5 [shape = 'u8[32768]{0}', space=vmem, size = 0x8000, scoped, tag = 'input window, operand 1, single buffered']
    #allocation6 [shape = 's32[1]{0}', space=sflag, size = 0x4, scoped, tag = 'scoped memory for tpu_custom_call.1']
    #allocation7 [shape = 'u8[32768]{0}', space=vmem, size = 0x8000, scoped, tag = 'input window, operand 3, single buffered']
    #allocation8 [shape = 'u8[8192]{0}', space=vmem, size = 0x2000, scoped, tag = 'output window, operand 0, single buffered']
    %10 = vsyncpa [#allocation3], 0
    %11 = vsyncpa [#allocation6], 0
    %12 = vsyncpa [#allocation4], 0
    // Predicated region
    $region2: #{tpu_custom_call.1} parent=1 // pred_check
      _
    $region3: #{tpu_custom_call.1} parent=1 // pred_check_branch
      %14 = sbr.rel (0) target = $region5
    $region4: #{tpu_custom_call.1} parent=1 // pred_region
      %s16 = ssub.s32 128, 128
      %17 = vsyncadd [#allocation3], %s16
      %s18 = sshll.u32 [#allocation2], 4
      %s19 = int_to_ptr.vmem [resolvable:$true] %s18
      %24 = dma.hbm_to_vmem [thread:$0]  %s0, 128, %s19, [#allocation3], 64, 64, 4
    $region5: #{tpu_custom_call.1} parent=1 // pred_fallthru
      _
    // Predicated region
    $region6: #{tpu_custom_call.1} parent=1 // pred_check
      _
    $region7: #{tpu_custom_call.1} parent=1 // pred_check_branch
      %26 = sbr.rel (0) target = $region9
    $region8: #{tpu_custom_call.1} parent=1 // pred_region
      %s28 = ssub.s32 1024, 1024
      %29 = vsyncadd [#allocation6], %s28
      %s30 = sshll.u32 [#allocation5], 4
      %s31 = int_to_ptr.vmem [resolvable:$true] %s30
      %36 = dma.hbm_to_vmem [thread:$0]  %s1, 1024, %s31, [#allocation6], 64, 64, 4
    $region9: #{tpu_custom_call.1} parent=1 // pred_fallthru
      _
    // Predicated region
    $region10: #{tpu_custom_call.1} parent=1 // pred_check
      _
    $region11: #{tpu_custom_call.1} parent=1 // pred_check_branch
      %38 = sbr.rel (0) target = $region13
    $region12: #{tpu_custom_call.1} parent=1 // pred_region
      _
    $region13: #{tpu_custom_call.1} parent=1 // pred_fallthru
      _
    // Predicated region
    $region14: #{tpu_custom_call.1} parent=1 // pred_check
      _
    $region15: #{tpu_custom_call.1} parent=1 // pred_check_branch
      %40 = sbr.rel (0) target = $region17
    $region16: #{tpu_custom_call.1} parent=1 // pred_region
      %s42 = ssub.s32 1024, 1024
      %43 = vsyncadd [#allocation6], %s42
      %s44 = sshll.u32 [#allocation7], 4
      %s45 = int_to_ptr.vmem [resolvable:$true] %s44
      %50 = dma.hbm_to_vmem [thread:$0]  %s3, 1024, %s45, [#allocation6], 64, 64, 4
    $region17: #{tpu_custom_call.1} parent=1 // pred_fallthru
      _
    // Predicated region
    $region18: #{tpu_custom_call.1} parent=1 // pred_check
      _
    $region19: #{tpu_custom_call.1} parent=1 // pred_check_branch
      %52 = sbr.rel (0) target = $region21
    $region20: #{tpu_custom_call.1} parent=1 // pred_region
      _
    $region21: #{tpu_custom_call.1} parent=1 // pred_fallthru
      _
    // Predicated region
    $region22: #{tpu_custom_call.1} parent=1 // pred_check
      _
    $region23: #{tpu_custom_call.1} parent=1 // pred_check_branch
      %54 = sbr.rel (0) target = $region25
    $region24: #{tpu_custom_call.1} parent=1 // pred_region
      %55 = dma.done [#allocation3], 128
    $region25: #{tpu_custom_call.1} parent=1 // pred_fallthru
      _
    // Predicated region
    $region26: #{tpu_custom_call.1} parent=1 // pred_check
      _
    $region27: #{tpu_custom_call.1} parent=1 // pred_check_branch
      %57 = sbr.rel (0) target = $region29
    $region28: #{tpu_custom_call.1} parent=1 // pred_region
      %58 = dma.done [#allocation6], 1024
    $region29: #{tpu_custom_call.1} parent=1 // pred_fallthru
      _
    // Predicated region
    $region30: #{tpu_custom_call.1} parent=1 // pred_check
      _
    $region31: #{tpu_custom_call.1} parent=1 // pred_check_branch
      %60 = sbr.rel (0) target = $region33
    $region32: #{tpu_custom_call.1} parent=1 // pred_region
      %61 = dma.done [#allocation6], 1024
    $region33: #{tpu_custom_call.1} parent=1 // pred_fallthru
      _
    %v63 = vld [vmem:[#allocation2] sm:$0xf]
    %v64 = vld [vmem:[#allocation2 + $0x4] sm:$0xf]
    %v65 = vld [vmem:[#allocation5] sm:$0xf]
    %v66 = vld [vmem:[#allocation5 + $0x4] sm:$0xf]
    %v67 = vld [vmem:[#allocation5 + $0x8] sm:$0xf]
    %v68 = vld [vmem:[#allocation5 + $0xc] sm:$0xf]
    %v69 = vld [vmem:[#allocation5 + $0x10] sm:$0xf]
    %v70 = vld [vmem:[#allocation5 + $0x14] sm:$0xf]
    %v71 = vld [vmem:[#allocation5 + $0x18] sm:$0xf]
    %v72 = vld [vmem:[#allocation5 + $0x1c] sm:$0xf]
    %v73 = vld [vmem:[#allocation5 + $0x20] sm:$0xf]
    %v74 = vld [vmem:[#allocation5 + $0x24] sm:$0xf]
    %v75 = vld [vmem:[#allocation5 + $0x28] sm:$0xf]
    %v76 = vld [vmem:[#allocation5 + $0x2c] sm:$0xf]
    %v77 = vld [vmem:[#allocation5 + $0x30] sm:$0xf]
    %v78 = vld [vmem:[#allocation5 + $0x34] sm:$0xf]
    %v79 = vld [vmem:[#allocation5 + $0x38] sm:$0xf]
    %v80 = vld [vmem:[#allocation5 + $0x3c] sm:$0xf]
    %v81 = vld [vmem:[%s2] sm:$0x1]
    %v83 = vlaneseq
    %v84 = vshrl.u32 %v83, 7
    %v85 = vsub.s32 0, %v84
    %v86 = vrot.slane %v81, %v85
    %v90 = vunpack.c.l.b16 %v63
    %v91 = vunpack.c.l.b16 %v64
    %v92 = vpack.c.b16 %v91, %v90
    %v110 = vunpack.c.l.b16 %v65
    %v111 = vunpack.c.l.b16 %v66
    %v112 = vunpack.c.l.b16 %v67
    %v113 = vunpack.c.l.b16 %v68
    %v114 = vunpack.c.l.b16 %v69
    %v115 = vunpack.c.l.b16 %v70
    %v116 = vunpack.c.l.b16 %v71
    %v117 = vunpack.c.l.b16 %v72
    %v118 = vunpack.c.l.b16 %v73
    %v119 = vunpack.c.l.b16 %v74
    %v120 = vunpack.c.l.b16 %v75
    %v121 = vunpack.c.l.b16 %v76
    %v122 = vunpack.c.l.b16 %v77
    %v123 = vunpack.c.l.b16 %v78
    %v124 = vunpack.c.l.b16 %v79
    %v125 = vunpack.c.l.b16 %v80
    %v126 = vpack.c.b16 %v111, %v110
    %v127 = vpack.c.b16 %v113, %v112
    %v128 = vpack.c.b16 %v115, %v114
    %v129 = vpack.c.b16 %v117, %v116
    %v130 = vpack.c.b16 %v119, %v118
    %v131 = vpack.c.b16 %v121, %v120
    %v132 = vpack.c.b16 %v123, %v122
    %v133 = vpack.c.b16 %v125, %v124
    %142 = vmatprep.subr.bf16.mxu0 0
    %143 = vmatpush1.bf16.msra.mxu0 %v126
    %144 = vmatprep.subr.bf16.mxu0 0
    %145 = vmatpush1.bf16.msra.mxu0 %v127
    %146 = vmatprep.subr.bf16.mxu0 0
    %147 = vmatpush1.bf16.msra.mxu0 %v128
    %148 = vmatprep.subr.bf16.mxu0 0
    %149 = vmatpush1.bf16.msra.mxu0 %v129
    %150 = vmatprep.subr.bf16.mxu0 0
    %151 = vmatpush1.bf16.msra.mxu0 %v130
    %152 = vmatprep.subr.bf16.mxu0 0
    %153 = vmatpush1.bf16.msra.mxu0 %v131
    %154 = vmatprep.subr.bf16.mxu0 0
    %155 = vmatpush1.bf16.msra.mxu0 %v132
    %156 = vmatprep.subr.bf16.mxu0 0
    %157 = vmatpush1.bf16.msra.mxu0 %v133
    %158 = vmatprep.subr.bf16.mxu0 0
    %159 = vmatpush1.bf16.msra.mxu0 0
    %160 = vmatprep.subr.bf16.mxu0 0
    %161 = vmatpush1.bf16.msra.mxu0 0
    %162 = vmatprep.subr.bf16.mxu0 0
    %163 = vmatpush1.bf16.msra.mxu0 0
    %164 = vmatprep.subr.bf16.mxu0 0
    %165 = vmatpush1.bf16.msra.mxu0 0
    %166 = vmatprep.subr.bf16.mxu0 0
    %167 = vmatpush1.bf16.msra.mxu0 0
    %168 = vmatprep.subr.bf16.mxu0 0
    %169 = vmatpush1.bf16.msra.mxu0 0
    %170 = vmatprep.subr.bf16.mxu0 0
    %171 = vmatpush1.bf16.msra.mxu0 0
    %172 = vmatprep.subr.bf16.mxu0 0
    %173 = vmatpush1.bf16.msra.mxu0 0
    %174 = vmatprep.mubr.bf16.mxu0 0
    %175 = vmatmul.mubr.bf16.gmra.mrb[0].mxu0 %v92
    %v176 = vpop.f32.mrb[0].mxu0
    %v177 = vadd.f32 %v86, %v176
    %v178 = vpop.f32.mrb[0].mxu0
    %v179 = vpop.f32.mrb[0].mxu0
    %v180 = vadd.f32 %v86, %v179
    %v181 = vpop.f32.mrb[0].mxu0
    %182 = vdwg.mxu0
    %v183 = vmul.f32 %v177, 0.5
    %v184 = vmul.f32 %v180, 0.5
    %v185 = vmul.f32 %v177, 0.70710677
    %v186 = vmul.f32 %v180, 0.70710677
    %v187 = verf.f32.pop %v185
    %v188 = verf.f32.pop %v186
    %v189 = vadd.f32 %v187, 1.0
    %v190 = vadd.f32 %v188, 1.0
    %v191 = vmul.f32 %v183, %v189
    %v192 = vmul.f32 %v184, %v190
    %v193 = vpack.c.bf16 %v192, %v191
    %v194 = vld [vmem:[#allocation7] sm:$0xf]
    %v195 = vld [vmem:[#allocation7 + $0x4] sm:$0xf]
    %v196 = vld [vmem:[#allocation7 + $0x8] sm:$0xf]
    %v197 = vld [vmem:[#allocation7 + $0xc] sm:$0xf]
    %v198 = vld [vmem:[#allocation7 + $0x10] sm:$0xf]
    %v199 = vld [vmem:[#allocation7 + $0x14] sm:$0xf]
    %v200 = vld [vmem:[#allocation7 + $0x18] sm:$0xf]
    %v201 = vld [vmem:[#allocation7 + $0x1c] sm:$0xf]
    %v202 = vld [vmem:[#allocation7 + $0x20] sm:$0xf]
    %v203 = vld [vmem:[#allocation7 + $0x24] sm:$0xf]
    %v204 = vld [vmem:[#allocation7 + $0x28] sm:$0xf]
    %v205 = vld [vmem:[#allocation7 + $0x2c] sm:$0xf]
    %v206 = vld [vmem:[#allocation7 + $0x30] sm:$0xf]
    %v207 = vld [vmem:[#allocation7 + $0x34] sm:$0xf]
    %v208 = vld [vmem:[#allocation7 + $0x38] sm:$0xf]
    %v209 = vld [vmem:[#allocation7 + $0x3c] sm:$0xf]
    %v210 = vld [vmem:[%s4] sm:$0x1]
    %v212 = vlaneseq
    %v213 = vshrl.u32 %v212, 7
    %v214 = vsub.s32 0, %v213
    %v215 = vrot.slane %v210, %v214
    %v233 = vunpack.c.l.b16 %v194
    %v234 = vunpack.c.l.b16 %v195
    %v235 = vunpack.c.l.b16 %v196
    %v236 = vunpack.c.l.b16 %v197
    %v237 = vunpack.c.l.b16 %v198
    %v238 = vunpack.c.l.b16 %v199
    %v239 = vunpack.c.l.b16 %v200
    %v240 = vunpack.c.l.b16 %v201
    %v241 = vunpack.c.l.b16 %v202
    %v242 = vunpack.c.l.b16 %v203
    %v243 = vunpack.c.l.b16 %v204
    %v244 = vunpack.c.l.b16 %v205
    %v245 = vunpack.c.l.b16 %v206
    %v246 = vunpack.c.l.b16 %v207
    %v247 = vunpack.c.l.b16 %v208
    %v248 = vunpack.c.l.b16 %v209
    %v249 = vpack.c.b16 %v234, %v233
    %v250 = vpack.c.b16 %v236, %v235
    %v251 = vpack.c.b16 %v238, %v237
    %v252 = vpack.c.b16 %v240, %v239
    %v253 = vpack.c.b16 %v242, %v241
    %v254 = vpack.c.b16 %v244, %v243
    %v255 = vpack.c.b16 %v246, %v245
    %v256 = vpack.c.b16 %v248, %v247
    %265 = vmatprep.subr.bf16.mxu0 0
    %266 = vmatpush1.bf16.msra.mxu0 %v249
    %267 = vmatprep.subr.bf16.mxu0 0
    %268 = vmatpush1.bf16.msra.mxu0 %v250
    %269 = vmatprep.subr.bf16.mxu0 0
    %270 = vmatpush1.bf16.msra.mxu0 %v251
    %271 = vmatprep.subr.bf16.mxu0 0
    %272 = vmatpush1.bf16.msra.mxu0 %v252
    %273 = vmatprep.subr.bf16.mxu0 0
    %274 = vmatpush1.bf16.msra.mxu0 %v253
    %275 = vmatprep.subr.bf16.mxu0 0
    %276 = vmatpush1.bf16.msra.mxu0 %v254
    %277 = vmatprep.subr.bf16.mxu0 0
    %278 = vmatpush1.bf16.msra.mxu0 %v255
    %279 = vmatprep.subr.bf16.mxu0 0
    %280 = vmatpush1.bf16.msra.mxu0 %v256
    %281 = vmatprep.subr.bf16.mxu0 0
    %282 = vmatpush1.bf16.msra.mxu0 0
    %283 = vmatprep.subr.bf16.mxu0 0
    %284 = vmatpush1.bf16.msra.mxu0 0
    %285 = vmatprep.subr.bf16.mxu0 0
    %286 = vmatpush1.bf16.msra.mxu0 0
    %287 = vmatprep.subr.bf16.mxu0 0
    %288 = vmatpush1.bf16.msra.mxu0 0
    %289 = vmatprep.subr.bf16.mxu0 0
    %290 = vmatpush1.bf16.msra.mxu0 0
    %291 = vmatprep.subr.bf16.mxu0 0
    %292 = vmatpush1.bf16.msra.mxu0 0
    %293 = vmatprep.subr.bf16.mxu0 0
    %294 = vmatpush1.bf16.msra.mxu0 0
    %295 = vmatprep.subr.bf16.mxu0 0
    %296 = vmatpush1.bf16.msra.mxu0 0
    %297 = vmatprep.mubr.bf16.mxu0 0
    %298 = vmatmul.mubr.bf16.gmra.mrb[0].mxu0 %v193
    %v299 = vpop.f32.mrb[0].mxu0
    %v300 = vadd.f32 %v215, %v299
    %v301 = vpop.f32.mrb[0].mxu0
    %v302 = vpop.f32.mrb[0].mxu0
    %v303 = vadd.f32 %v215, %v302
    %v304 = vpop.f32.mrb[0].mxu0
    %305 = vdwg.mxu0
    %306 = vst [vmem:[#allocation8] sm:$0xff] %v300
    %307 = vst [vmem:[#allocation8 + $0x8] sm:$0xff] %v303
    // Predicated region
    $region34: #{tpu_custom_call.1} parent=1 // pred_check
      _
    $region35: #{tpu_custom_call.1} parent=1 // pred_check_branch
      %309 = sbr.rel (0) target = $region37
    $region36: #{tpu_custom_call.1} parent=1 // pred_region
      %s311 = ssub.s32 256, 256
      %312 = vsyncadd [#allocation4], %s311
      %s313 = sshll.u32 [#allocation8], 4
      %s314 = int_to_ptr.vmem [resolvable:$true] %s313
      %319 = dma.vmem_to_hbm [thread:$0]  %s314, 256, %s5, [#allocation4], 128, 128, 8
    $region37: #{tpu_custom_call.1} parent=1 // pred_fallthru
      _
    // Predicated region
    $region38: #{tpu_custom_call.1} parent=1 // pred_check
      _
    $region39: #{tpu_custom_call.1} parent=1 // pred_check_branch
      %321 = sbr.rel (0) target = $region41
    $region40: #{tpu_custom_call.1} parent=1 // pred_region
      %322 = dma.done [#allocation4], 256
    $region41: #{tpu_custom_call.1} parent=1 // pred_fallthru
      _
    %323 = vsyncpa [#allocation3], 1
    %324 = vsyncpa [#allocation6], 1
    %325 = vsyncpa [#allocation4], 1

</llo_original>
